<compile_context>
chip_gen: v7x
topology: tpu7x:2x2x1
jax: 0.10.0
libtpu: 0.0.40
codegen_flags: <defaults>
</compile_context>

<pallas_src>
import functools

import jax
import jax.numpy as jnp
from jax.experimental import pallas as pl
from jax.experimental.pallas import tpu as pltpu

_LANES = 128
_TARGET_BLOCK_BYTES = 1 << 20   # ~1 MiB of native-dtype data per input block
_FAST_PATH_ELEMS = 1 << 16      # below this, plain XLA beats a pallas launch


def _round_up(x, m):
    return (x + m - 1) // m * m


def _sq_err_sums_kernel(n_preds, block_rows, bpc, total_rows, mask_possible,
                        *refs):
    """Accumulates sum((pred_p - tgt)^2) into SMEM out[0, p] (one slot/core)."""
    pred_refs = refs[:n_preds]
    tgt_ref = refs[n_preds]
    out_ref = refs[n_preds + 1]
    acc_refs = refs[n_preds + 2:]

    c = pl.program_id(0)   # core / row-range axis ("parallel")
    k = pl.program_id(1)   # reduction axis ("arbitrary")

    @pl.when(k == 0)
    def _():
        for acc in acc_refs:
            acc[...] = jnp.zeros_like(acc)

    t = tgt_ref[...].astype(jnp.float32)

    def accumulate(apply_mask):
        if apply_mask:
            row_start = (c * bpc + k) * block_rows
            row_ids = row_start + jax.lax.broadcasted_iota(
                jnp.int32, (block_rows, _LANES), 0)
            valid = row_ids < total_rows
        for p in range(n_preds):
            d = pred_refs[p][...].astype(jnp.float32) - t
            if apply_mask:
                # Mask the difference (not the refs) so garbage rows in a
                # partial / virtual block can never reach the sum.
                d = jnp.where(valid, d, 0.0)
            sq = d * d
            # Tile-aligned reshape + leading-axis sum: pure vreg adds; result
            # is one (8, 128) vreg added into the resident accumulator.
            acc_refs[p][...] += sq.reshape(block_rows // 8, 8, _LANES).sum(axis=0)

    if mask_possible:
        needs_mask = (c * bpc + k + 1) * block_rows > total_rows

        @pl.when(needs_mask)
        def _():
            accumulate(True)

        @pl.when(jnp.logical_not(needs_mask))
        def _():
            accumulate(False)
    else:
        accumulate(False)

    @pl.when(k == pl.num_programs(1) - 1)
    def _():
        for p in range(n_preds):
            out_ref[0, p] = jnp.sum(acc_refs[p][...])


def _sq_err_sums(preds, tgt):
    """Returns a (n_preds,) f32 vector: sum((pred_p - tgt)^2) for each pred."""
    n = tgt.size
    n_preds = len(preds)

    flat_preds = [p.reshape(-1) for p in preds]
    flat_tgt = tgt.reshape(-1)

    # 128-aligned prefix goes through the kernel; the <=127-element tail (rare
    # path) is added via plain XLA below — no jnp.pad HBM copies.
    n_main = (n // _LANES) * _LANES
    rows = n_main // _LANES

    # Byte-based block sizing: ~1 MiB of native-dtype data per input block.
    itemsize = max(jnp.dtype(a.dtype).itemsize for a in flat_preds + [flat_tgt])
    cap_rows = max(8, (_TARGET_BLOCK_BYTES // (_LANES * itemsize)) // 8 * 8)
    block_rows = min(cap_rows, _round_up(rows, 8))

    total_blocks = pl.cdiv(rows, block_rows)
    n_cores = 2 if total_blocks >= 2 else 1   # 2-TC split pays off on v7x
    bpc = pl.cdiv(total_blocks, n_cores)       # row-blocks per core
    mask_possible = (n_cores * bpc * block_rows) > rows
    last_block = total_blocks - 1

    mats = []
    for f in flat_preds + [flat_tgt]:
        ff = f if n_main == n else f[:n_main]
        mats.append(ff.reshape(rows, _LANES))

    def in_index_map(c, k):
        # Clamp so the DMA never starts past the array; logically-OOB rows of
        # virtual / partial blocks are zeroed by the in-kernel mask.
        return (jnp.minimum(c * bpc + k, last_block), 0)

    kernel = functools.partial(
        _sq_err_sums_kernel, n_preds, block_rows, bpc, rows, mask_possible)

    out = pl.pallas_call(
        kernel,
        out_shape=jax.ShapeDtypeStruct((n_cores, n_preds), jnp.float32),
        grid_spec=pltpu.PrefetchScalarGridSpec(
            num_scalar_prefetch=0,
            grid=(n_cores, bpc),
            in_specs=[
                pl.BlockSpec((block_rows, _LANES), in_index_map)
                for _ in range(n_preds + 1)
            ],
            out_specs=pl.BlockSpec(
                (1, n_preds), lambda c, k: (c, 0),
                memory_space=pltpu.MemorySpace.SMEM),
            scratch_shapes=[
                pltpu.VMEM((8, _LANES), jnp.float32) for _ in range(n_preds)
            ],
        ),
        compiler_params=pltpu.CompilerParams(
            dimension_semantics=("parallel", "arbitrary")),
    )(*mats)

    sums = jnp.sum(out, axis=0)   # combine per-core partials -> (n_preds,)

    if n_main < n:
        t_tail = flat_tgt[n_main:].astype(jnp.float32)
        tail = jnp.stack([
            jnp.sum((fp[n_main:].astype(jnp.float32) - t_tail) ** 2)
            for fp in flat_preds
        ])
        sums = sums + tail
    return sums


def rgb_mse_loss(inputs, targets):
    """Pallas-backed equivalent of RGB_MSELoss.forward."""
    preds = [inputs["rgb_coarse"]]
    if "rgb_fine" in inputs:
        preds.append(inputs["rgb_fine"])

    n = targets.size
    if n < _FAST_PATH_ELEMS:
        # Small batch: launch + pipeline ramp would dominate; plain XLA wins.
        t32 = targets.astype(jnp.float32)
        total = jnp.float32(0.0)
        for p in preds:
            total = total + jnp.mean((p.astype(jnp.float32) - t32) ** 2)
        return total

    sums = _sq_err_sums(preds, targets)
    return jnp.sum(sums) / jnp.float32(n)


if __name__ == "__main__":
    key = jax.random.PRNGKey(0)
    ks = jax.random.split(key, 12)

    # --- (a) kernel path, single block: 24576 rays -> 73728 elems -> 576 rows.
    n_rays = 24576
    rgb_coarse = jax.random.uniform(ks[0], (n_rays, 3), dtype=jnp.float32)
    rgb_fine = jax.random.uniform(ks[1], (n_rays, 3), dtype=jnp.float32)
    targets = jax.random.uniform(ks[2], (n_rays, 3), dtype=jnp.float32)
    loss = jax.block_until_ready(
        rgb_mse_loss({"rgb_coarse": rgb_coarse, "rgb_fine": rgb_fine}, targets))
    ref = jnp.mean((rgb_coarse - targets) ** 2) + jnp.mean((rgb_fine - targets) ** 2)
    assert jnp.allclose(loss, ref, rtol=1e-4, atol=1e-6), (loss, ref)

    # --- (b) coarse-only variant (no 'rgb_fine').
    loss_c = jax.block_until_ready(
        rgb_mse_loss({"rgb_coarse": rgb_coarse}, targets))
    ref_c = jnp.mean((rgb_coarse - targets) ** 2)
    assert jnp.allclose(loss_c, ref_c, rtol=1e-4, atol=1e-6), (loss_c, ref_c)

    # --- (c) 2-core split + masked partial block + <128-elem tail:
    #     131075 rays -> 393225 elems (9-elem tail), 3072 rows, 2 blocks of 2048.
    n_big = 131075
    bc = jax.random.uniform(ks[3], (n_big, 3), dtype=jnp.float32)
    bf = jax.random.uniform(ks[4], (n_big, 3), dtype=jnp.float32)
    bt = jax.random.uniform(ks[5], (n_big, 3), dtype=jnp.float32)
    loss_b = jax.block_until_ready(
        rgb_mse_loss({"rgb_coarse": bc, "rgb_fine": bf}, bt))
    ref_b = jnp.mean((bc - bt) ** 2) + jnp.mean((bf - bt) ** 2)
    assert jnp.allclose(loss_b, ref_b, rtol=1e-4, atol=1e-6), (loss_b, ref_b)

    # --- (d) bf16 predictions, f32 targets: native-dtype DMA + in-kernel cast.
    n_h = 49152
    hc = jax.random.uniform(ks[6], (n_h, 3), dtype=jnp.float32).astype(jnp.bfloat16)
    hf = jax.random.uniform(ks[7], (n_h, 3), dtype=jnp.float32).astype(jnp.bfloat16)
    ht = jax.random.uniform(ks[8], (n_h, 3), dtype=jnp.float32)
    loss_h = jax.block_until_ready(
        rgb_mse_loss({"rgb_coarse": hc, "rgb_fine": hf}, ht))
    ref_h = (jnp.mean((hc.astype(jnp.float32) - ht) ** 2)
             + jnp.mean((hf.astype(jnp.float32) - ht) ** 2))
    assert jnp.allclose(loss_h, ref_h, rtol=1e-4, atol=1e-6), (loss_h, ref_h)

    # --- (e) tiny batch: exercises the small-input fast path.
    n_small = 256
    sc = jax.random.uniform(ks[9], (n_small, 3), dtype=jnp.float32)
    sf = jax.random.uniform(ks[10], (n_small, 3), dtype=jnp.float32)
    st = jax.random.uniform(ks[11], (n_small, 3), dtype=jnp.float32)
    loss_s = jax.block_until_ready(
        rgb_mse_loss({"rgb_coarse": sc, "rgb_fine": sf}, st))
    ref_s = jnp.mean((sc - st) ** 2) + jnp.mean((sf - st) ** 2)
    assert jnp.allclose(loss_s, ref_s, rtol=1e-4, atol=1e-6), (loss_s, ref_s)

    print("KERNEL_OK")
</pallas_src>

<mosaic_0001>
module attributes {stable_mosaic.version = 11 : i64} {
  func.func @_sq_err_sums_kernel(%arg0: i32, %arg1: i32, %arg2: memref<576x128xf32, #tpu.memory_space<vmem>>, %arg3: memref<576x128xf32, #tpu.memory_space<vmem>>, %arg4: memref<576x128xf32, #tpu.memory_space<vmem>>, %arg5: memref<1x2xf32, #tpu.memory_space<smem>>, %arg6: memref<8x128xf32, #tpu.memory_space<vmem>>, %arg7: memref<8x128xf32, #tpu.memory_space<vmem>>) attributes {dimension_semantics = [#tpu.dimension_semantics<parallel>, #tpu.dimension_semantics<arbitrary>], iteration_bounds = array<i64: 1, 1>, scalar_prefetch = 0 : i64, scratch_operands = 2 : i64, tpu.core_type = #tpu.core_type<tc>, window_params = [{transform_indices = @transform_0, window_bounds = array<i64: 576, 128>}, {transform_indices = @transform_1, window_bounds = array<i64: 576, 128>}, {transform_indices = @transform_2, window_bounds = array<i64: 576, 128>}, {transform_indices = @transform_3, window_bounds = array<i64: 1, 2>}]} {
    %c0_i32 = arith.constant 0 : i32
    %0 = arith.cmpi eq, %arg1, %c0_i32 : i32
    %1 = arith.extui %0 : i1 to i32
    %c0_i32_0 = arith.constant 0 : i32
    %2 = arith.cmpi ne, %1, %c0_i32_0 : i32
    scf.if %2 {
      %cst_17 = arith.constant 0.000000e+00 : f32
      %23 = vector.broadcast %cst_17 : f32 to vector<8x128xf32>
      %c0_18 = arith.constant 0 : index
      %c0_19 = arith.constant 0 : index
      %24 = vector.load %arg6[%c0_18, %c0_19] : memref<8x128xf32, #tpu.memory_space<vmem>>, vector<8x128xf32>
      tpu.vector_store %arg6[%c0_18, %c0_19], %23 {strides = array<i32>} : memref<8x128xf32, #tpu.memory_space<vmem>>, vector<8x128xf32>,
      %cst_20 = arith.constant 0.000000e+00 : f32
      %25 = vector.broadcast %cst_20 : f32 to vector<8x128xf32>
      %c0_21 = arith.constant 0 : index
      %c0_22 = arith.constant 0 : index
      %26 = vector.load %arg7[%c0_21, %c0_22] : memref<8x128xf32, #tpu.memory_space<vmem>>, vector<8x128xf32>
      tpu.vector_store %arg7[%c0_21, %c0_22], %25 {strides = array<i32>} : memref<8x128xf32, #tpu.memory_space<vmem>>, vector<8x128xf32>,
    } else {
    }
    %c0 = arith.constant 0 : index
    %c0_1 = arith.constant 0 : index
    %3 = vector.load %arg4[%c0, %c0_1] : memref<576x128xf32, #tpu.memory_space<vmem>>, vector<576x128xf32>
    %c0_2 = arith.constant 0 : index
    %c0_3 = arith.constant 0 : index
    %4 = vector.load %arg2[%c0_2, %c0_3] : memref<576x128xf32, #tpu.memory_space<vmem>>, vector<576x128xf32>
    %5 = arith.subf %4, %3 : vector<576x128xf32>
    %6 = arith.mulf %5, %5 : vector<576x128xf32>
    %c0_4 = arith.constant 0 : index
    %c0_5 = arith.constant 0 : index
    %7 = vector.load %arg6[%c0_4, %c0_5] : memref<8x128xf32, #tpu.memory_space<vmem>>, vector<8x128xf32>
    %8 = vector.shape_cast %6 : vector<576x128xf32> to vector<72x8x128xf32>
    %cst = arith.constant dense<0.000000e+00> : vector<8x128xf32>
    %9 = vector.multi_reduction <add>, %8, %cst [0] : vector<72x8x128xf32> to vector<8x128xf32>
    %10 = arith.addf %7, %9 : vector<8x128xf32>
    %c0_6 = arith.constant 0 : index
    %c0_7 = arith.constant 0 : index
    %11 = vector.load %arg6[%c0_6, %c0_7] : memref<8x128xf32, #tpu.memory_space<vmem>>, vector<8x128xf32>
    tpu.vector_store %arg6[%c0_6, %c0_7], %10 {strides = array<i32>} : memref<8x128xf32, #tpu.memory_space<vmem>>, vector<8x128xf32>,
    %c0_8 = arith.constant 0 : index
    %c0_9 = arith.constant 0 : index
    %12 = vector.load %arg3[%c0_8, %c0_9] : memref<576x128xf32, #tpu.memory_space<vmem>>, vector<576x128xf32>
    %13 = arith.subf %12, %3 : vector<576x128xf32>
    %14 = arith.mulf %13, %13 : vector<576x128xf32>
    %c0_10 = arith.constant 0 : index
    %c0_11 = arith.constant 0 : index
    %15 = vector.load %arg7[%c0_10, %c0_11] : memref<8x128xf32, #tpu.memory_space<vmem>>, vector<8x128xf32>
    %16 = vector.shape_cast %14 : vector<576x128xf32> to vector<72x8x128xf32>
    %cst_12 = arith.constant dense<0.000000e+00> : vector<8x128xf32>
    %17 = vector.multi_reduction <add>, %16, %cst_12 [0] : vector<72x8x128xf32> to vector<8x128xf32>
    %18 = arith.addf %15, %17 : vector<8x128xf32>
    %c0_13 = arith.constant 0 : index
    %c0_14 = arith.constant 0 : index
    %19 = vector.load %arg7[%c0_13, %c0_14] : memref<8x128xf32, #tpu.memory_space<vmem>>, vector<8x128xf32>
    tpu.vector_store %arg7[%c0_13, %c0_14], %18 {strides = array<i32>} : memref<8x128xf32, #tpu.memory_space<vmem>>, vector<8x128xf32>,
    %c0_i32_15 = arith.constant 0 : i32
    %20 = arith.cmpi eq, %arg1, %c0_i32_15 : i32
    %21 = arith.extui %20 : i1 to i32
    %c0_i32_16 = arith.constant 0 : i32
    %22 = arith.cmpi ne, %21, %c0_i32_16 : i32
    scf.if %22 {
      %c0_17 = arith.constant 0 : index
      %c0_18 = arith.constant 0 : index
      %23 = vector.load %arg6[%c0_17, %c0_18] : memref<8x128xf32, #tpu.memory_space<vmem>>, vector<8x128xf32>
      %24 = vector.shape_cast %23 : vector<8x128xf32> to vector<1x8x128xf32>
      %cst_19 = arith.constant dense<0.000000e+00> : vector<1xf32>
      %25 = vector.multi_reduction <add>, %24, %cst_19 [1, 2] : vector<1x8x128xf32> to vector<1xf32>
      %26 = vector.shape_cast %25 : vector<1xf32> to vector<1x1x1xf32>
      %27 = vector.extract %26[0, 0, 0] : f32 from vector<1x1x1xf32>
      %c0_20 = arith.constant 0 : index
      %c0_21 = arith.constant 0 : index
      %28 = memref.load %arg5[%c0_20, %c0_21] : memref<1x2xf32, #tpu.memory_space<smem>>
      memref.store %27, %arg5[%c0_20, %c0_21] : memref<1x2xf32, #tpu.memory_space<smem>>
      %c0_22 = arith.constant 0 : index
      %c0_23 = arith.constant 0 : index
      %29 = vector.load %arg7[%c0_22, %c0_23] : memref<8x128xf32, #tpu.memory_space<vmem>>, vector<8x128xf32>
      %30 = vector.shape_cast %29 : vector<8x128xf32> to vector<1x8x128xf32>
      %cst_24 = arith.constant dense<0.000000e+00> : vector<1xf32>
      %31 = vector.multi_reduction <add>, %30, %cst_24 [1, 2] : vector<1x8x128xf32> to vector<1xf32>
      %32 = vector.shape_cast %31 : vector<1xf32> to vector<1x1x1xf32>
      %33 = vector.extract %32[0, 0, 0] : f32 from vector<1x1x1xf32>
      %c0_25 = arith.constant 0 : index
      %c1 = arith.constant 1 : index
      %34 = memref.load %arg5[%c0_25, %c1] : memref<1x2xf32, #tpu.memory_space<smem>>
      memref.store %33, %arg5[%c0_25, %c1] : memref<1x2xf32, #tpu.memory_space<smem>>
    } else {
    }
    return
  }
  func.func @transform_0(%arg0: i32, %arg1: i32) -> (i32, i32) {
    %c1_i32 = arith.constant 1 : i32
    %0 = arith.muli %arg0, %c1_i32 : i32
    %1 = arith.addi %0, %arg1 : i32
    %c0_i32 = arith.constant 0 : i32
    %2 = arith.minsi %1, %c0_i32 : i32
    %c0_i32_0 = arith.constant 0 : i32
    %c0_i32_1 = arith.constant 0 : i32
    return %2, %c0_i32_0 : i32, i32
  }
  func.func @transform_1(%arg0: i32, %arg1: i32) -> (i32, i32) {
    %c1_i32 = arith.constant 1 : i32
    %0 = arith.muli %arg0, %c1_i32 : i32
    %1 = arith.addi %0, %arg1 : i32
    %c0_i32 = arith.constant 0 : i32
    %2 = arith.minsi %1, %c0_i32 : i32
    %c0_i32_0 = arith.constant 0 : i32
    %c0_i32_1 = arith.constant 0 : i32
    return %2, %c0_i32_0 : i32, i32
  }
  func.func @transform_2(%arg0: i32, %arg1: i32) -> (i32, i32) {
    %c1_i32 = arith.constant 1 : i32
    %0 = arith.muli %arg0, %c1_i32 : i32
    %1 = arith.addi %0, %arg1 : i32
    %c0_i32 = arith.constant 0 : i32
    %2 = arith.minsi %1, %c0_i32 : i32
    %c0_i32_0 = arith.constant 0 : i32
    %c0_i32_1 = arith.constant 0 : i32
    return %2, %c0_i32_0 : i32, i32
  }
  func.func @transform_3(%arg0: i32, %arg1: i32) -> (i32, i32) {
    %c0_i32 = arith.constant 0 : i32
    %c0_i32_0 = arith.constant 0 : i32
    return %arg0, %c0_i32 : i32, i32
  }
}

</mosaic_0001>

<llo_original>
// kernel: tpu_custom_call.1
$region0: #{tpu_custom_call.1}
  #allocation0 [shape = 'u32[]', space=smem, size = 0x4, offset = 0x4, fixed_abs, tag = 'smem constant byte address 0x4 - core index']
  #allocation1 [shape = 'u32[144,128]{1,0:T(1,128)}', space=vmem, size = 0x12000, scoped, tag = 'internal scratch']
  #allocation2 [shape = 'f32[8,128]{1,0:T(8,128)}', space=vmem, size = 0x1000, scoped, tag = 'scratch operand']
  #allocation3 [shape = 'f32[8,128]{1,0:T(8,128)}', space=vmem, size = 0x1000, scoped, tag = 'scratch operand']
  %s0 = inlined_call_operand.hbm [shape: f32[576,128], index: 0, kind: input, shape index: {}]
  %s1 = inlined_call_operand.hbm [shape: f32[576,128], index: 1, kind: input, shape index: {}]
  %s2 = inlined_call_operand.hbm [shape: f32[576,128], index: 2, kind: input, shape index: {}]
  %s3 = inlined_call_operand.hbm [shape: f32[1,2], index: 3, kind: output, shape index: {}]
  %s4 = sld [smem:[#allocation0]]
  $region42: #{tpu_custom_call.1} parent=0
    _
  %s6 = ssub.s32 1, %s4
  %s7 = scalar_select 0, %s6, %s4
  $region1: #{tpu_custom_call.1} parent=0
    #allocation4 [shape = 'u8[294912]{0}', space=vmem, size = 0x48000, scoped, tag = 'input window, operand 0, single buffered']
    #allocation5 [shape = 's32[1]{0}', space=sflag, size = 0x4, scoped, tag = 'scoped memory for tpu_custom_call.1']
    #allocation6 [shape = 's32[1]{0}', space=sflag, size = 0x4, scoped, tag = 'scoped memory for tpu_custom_call.1']
    #allocation7 [shape = 'u8[294912]{0}', space=vmem, size = 0x48000, scoped, tag = 'input window, operand 1, single buffered']
    #allocation8 [shape = 's32[1]{0}', space=sflag, size = 0x4, scoped, tag = 'scoped memory for tpu_custom_call.1']
    #allocation9 [shape = 'u8[294912]{0}', space=vmem, size = 0x48000, scoped, tag = 'input window, operand 2, single buffered']
    #allocation10 [shape = 'u8[512]{0}', space=smem, size = 0x200, scoped, tag = 'output window, operand 0, single buffered']
    %8 = vsyncpa [#allocation5], 0
    %9 = vsyncpa [#allocation8], 0
    %10 = vsyncpa [#allocation6], 0
    // Predicated region
    $region2: #{tpu_custom_call.1} parent=1 // pred_check
      _
    $region3: #{tpu_custom_call.1} parent=1 // pred_check_branch
      %12 = sbr.rel (0) target = $region5
    $region4: #{tpu_custom_call.1} parent=1 // pred_region
      %s13 = sadd.s32 0, 0
      %p14 = scmp.lt.s32.totalorder %s13, 0
      %s15 = scalar_select %p14, %s13, 0
      %s16 = smul.u32 72, %s15
      %s18 = ssub.s32 9216, 9216
      %19 = vsyncadd [#allocation5], %s18
      %s20 = smul.addr %s16, 128
      %s21 = scalar_lea.hbm %s0, %s20
      %s22 = sshll.u32 [#allocation4], 4
      %s23 = int_to_ptr.vmem [resolvable:$true] %s22
      %28 = dma.hbm_to_vmem [thread:$0]  %s21, 9216, %s23, [#allocation5], 128, 128, 8
    $region5: #{tpu_custom_call.1} parent=1 // pred_fallthru
      _
    // Predicated region
    $region6: #{tpu_custom_call.1} parent=1 // pred_check
      _
    $region7: #{tpu_custom_call.1} parent=1 // pred_check_branch
      %30 = sbr.rel (0) target = $region9
    $region8: #{tpu_custom_call.1} parent=1 // pred_region
      %s31 = sadd.s32 0, 0
      %p32 = scmp.lt.s32.totalorder %s31, 0
      %s33 = scalar_select %p32, %s31, 0
      %s34 = smul.u32 72, %s33
      %s36 = ssub.s32 9216, 9216
      %37 = vsyncadd [#allocation8], %s36
      %s38 = smul.addr %s34, 128
      %s39 = scalar_lea.hbm %s1, %s38
      %s40 = sshll.u32 [#allocation7], 4
      %s41 = int_to_ptr.vmem [resolvable:$true] %s40
      %46 = dma.hbm_to_vmem [thread:$0]  %s39, 9216, %s41, [#allocation8], 128, 128, 8
    $region9: #{tpu_custom_call.1} parent=1 // pred_fallthru
      _
    // Predicated region
    $region10: #{tpu_custom_call.1} parent=1 // pred_check
      _
    $region11: #{tpu_custom_call.1} parent=1 // pred_check_branch
      %48 = sbr.rel (0) target = $region13
    $region12: #{tpu_custom_call.1} parent=1 // pred_region
      %s49 = sadd.s32 0, 0
      %p50 = scmp.lt.s32.totalorder %s49, 0
      %s51 = scalar_select %p50, %s49, 0
      %s52 = smul.u32 72, %s51
      %s54 = ssub.s32 9216, 9216
      %55 = vsyncadd [#allocation8], %s54
      %s56 = smul.addr %s52, 128
      %s57 = scalar_lea.hbm %s2, %s56
      %s58 = sshll.u32 [#allocation9], 4
      %s59 = int_to_ptr.vmem [resolvable:$true] %s58
      %64 = dma.hbm_to_vmem [thread:$0]  %s57, 9216, %s59, [#allocation8], 128, 128, 8
    $region13: #{tpu_custom_call.1} parent=1 // pred_fallthru
      _
    // Predicated region
    $region14: #{tpu_custom_call.1} parent=1 // pred_check
      _
    $region15: #{tpu_custom_call.1} parent=1 // pred_check_branch
      %66 = sbr.rel (0) target = $region17
    $region16: #{tpu_custom_call.1} parent=1 // pred_region
      %67 = dma.done [#allocation5], 9216
    $region17: #{tpu_custom_call.1} parent=1 // pred_fallthru
      _
    // Predicated region
    $region18: #{tpu_custom_call.1} parent=1 // pred_check
      _
    $region19: #{tpu_custom_call.1} parent=1 // pred_check_branch
      %69 = sbr.rel (0) target = $region21
    $region20: #{tpu_custom_call.1} parent=1 // pred_region
      %70 = dma.done [#allocation8], 9216
    $region21: #{tpu_custom_call.1} parent=1 // pred_fallthru
      _
    // Predicated region
    $region22: #{tpu_custom_call.1} parent=1 // pred_check
      _
    $region23: #{tpu_custom_call.1} parent=1 // pred_check_branch
      %72 = sbr.rel (0) target = $region25
    $region24: #{tpu_custom_call.1} parent=1 // pred_region
      %73 = dma.done [#allocation8], 9216
    $region25: #{tpu_custom_call.1} parent=1 // pred_fallthru
      _
    %s74 = sadd.s32 0, 0
    %p75 = scmp.lt.s32.totalorder %s74, 0
    %s76 = scalar_select %p75, %s74, 0
    %s77 = smul.u32 72, %s76
    %s78 = sadd.s32 0, 0
    %p79 = scmp.lt.s32.totalorder %s78, 0
    %s80 = scalar_select %p79, %s78, 0
    %s81 = smul.u32 72, %s80
    %s82 = sadd.s32 0, 0
    %p83 = scmp.lt.s32.totalorder %s82, 0
    %s84 = scalar_select %p83, %s82, 0
    %s85 = smul.u32 72, %s84
    %p86 = scmp.eq.s32.totalorder 0, 0
    // Predicated region
    $region26: #{tpu_custom_call.1} parent=1 // pred_check
      %p87 = pneg %p86
    $region27: #{tpu_custom_call.1} parent=1 // pred_check_branch
      %89 = sbr.rel (%p87) target = $region29
    $region28: #{tpu_custom_call.1} parent=1 // pred_region
      %90 = vst [vmem:[#allocation2] sm:$0xff] 0.0
      %91 = vst [vmem:[#allocation3] sm:$0xff] 0.0
    $region29: #{tpu_custom_call.1} parent=1 // pred_fallthru
      _
    %v92 = vld [vmem:[#allocation9] sm:$0xff]
    %v93 = vld [vmem:[#allocation9 + $0x8] sm:$0xff]
    %v94 = vld [vmem:[#allocation9 + $0x10] sm:$0xff]
    %v95 = vld [vmem:[#allocation9 + $0x18] sm:$0xff]
    %v96 = vld [vmem:[#allocation9 + $0x20] sm:$0xff]
    %v97 = vld [vmem:[#allocation9 + $0x28] sm:$0xff]
    %v98 = vld [vmem:[#allocation9 + $0x30] sm:$0xff]
    %v99 = vld [vmem:[#allocation9 + $0x38] sm:$0xff]
    %v100 = vld [vmem:[#allocation9 + $0x40] sm:$0xff]
    %v101 = vld [vmem:[#allocation9 + $0x48] sm:$0xff]
    %v102 = vld [vmem:[#allocation9 + $0x50] sm:$0xff]
    %v103 = vld [vmem:[#allocation9 + $0x58] sm:$0xff]
    %v104 = vld [vmem:[#allocation9 + $0x60] sm:$0xff]
    %v105 = vld [vmem:[#allocation9 + $0x68] sm:$0xff]
    %v106 = vld [vmem:[#allocation9 + $0x70] sm:$0xff]
    %v107 = vld [vmem:[#allocation9 + $0x78] sm:$0xff]
    %v108 = vld [vmem:[#allocation9 + $0x80] sm:$0xff]
    %v109 = vld [vmem:[#allocation9 + $0x88] sm:$0xff]
    %v110 = vld [vmem:[#allocation9 + $0x90] sm:$0xff]
    %v111 = vld [vmem:[#allocation9 + $0x98] sm:$0xff]
    %v112 = vld [vmem:[#allocation9 + $0xa0] sm:$0xff]
    %v113 = vld [vmem:[#allocation9 + $0xa8] sm:$0xff]
    %v114 = vld [vmem:[#allocation9 + $0xb0] sm:$0xff]
    %v115 = vld [vmem:[#allocation9 + $0xb8] sm:$0xff]
    %v116 = vld [vmem:[#allocation9 + $0xc0] sm:$0xff]
    %v117 = vld [vmem:[#allocation9 + $0xc8] sm:$0xff]
    %v118 = vld [vmem:[#allocation9 + $0xd0] sm:$0xff]
    %v119 = vld [vmem:[#allocation9 + $0xd8] sm:$0xff]
    %v120 = vld [vmem:[#allocation9 + $0xe0] sm:$0xff]
    %v121 = vld [vmem:[#allocation9 + $0xe8] sm:$0xff]
    %v122 = vld [vmem:[#allocation9 + $0xf0] sm:$0xff]
    %v123 = vld [vmem:[#allocation9 + $0xf8] sm:$0xff]
    %v124 = vld [vmem:[#allocation9 + $0x100] sm:$0xff]
    %v125 = vld [vmem:[#allocation9 + $0x108] sm:$0xff]
    %v126 = vld [vmem:[#allocation9 + $0x110] sm:$0xff]
    %v127 = vld [vmem:[#allocation9 + $0x118] sm:$0xff]
    %v128 = vld [vmem:[#allocation9 + $0x120] sm:$0xff]
    %v129 = vld [vmem:[#allocation9 + $0x128] sm:$0xff]
    %v130 = vld [vmem:[#allocation9 + $0x130] sm:$0xff]
    %v131 = vld [vmem:[#allocation9 + $0x138] sm:$0xff]
    %v132 = vld [vmem:[#allocation9 + $0x140] sm:$0xff]
    %v133 = vld [vmem:[#allocation9 + $0x148] sm:$0xff]
    %v134 = vld [vmem:[#allocation9 + $0x150] sm:$0xff]
    %v135 = vld [vmem:[#allocation9 + $0x158] sm:$0xff]
    %v136 = vld [vmem:[#allocation9 + $0x160] sm:$0xff]
    %v137 = vld [vmem:[#allocation9 + $0x168] sm:$0xff]
    %v138 = vld [vmem:[#allocation9 + $0x170] sm:$0xff]
    %v139 = vld [vmem:[#allocation9 + $0x178] sm:$0xff]
    %v140 = vld [vmem:[#allocation9 + $0x180] sm:$0xff]
    %v141 = vld [vmem:[#allocation9 + $0x188] sm:$0xff]
    %v142 = vld [vmem:[#allocation9 + $0x190] sm:$0xff]
    %v143 = vld [vmem:[#allocation9 + $0x198] sm:$0xff]
    %v144 = vld [vmem:[#allocation9 + $0x1a0] sm:$0xff]
    %v145 = vld [vmem:[#allocation9 + $0x1a8] sm:$0xff]
    %v146 = vld [vmem:[#allocation9 + $0x1b0] sm:$0xff]
    %v147 = vld [vmem:[#allocation9 + $0x1b8] sm:$0xff]
    %v148 = vld [vmem:[#allocation9 + $0x1c0] sm:$0xff]
    %v149 = vld [vmem:[#allocation9 + $0x1c8] sm:$0xff]
    %v150 = vld [vmem:[#allocation9 + $0x1d0] sm:$0xff]
    %v151 = vld [vmem:[#allocation9 + $0x1d8] sm:$0xff]
    %v152 = vld [vmem:[#allocation9 + $0x1e0] sm:$0xff]
    %v153 = vld [vmem:[#allocation9 + $0x1e8] sm:$0xff]
    %v154 = vld [vmem:[#allocation9 + $0x1f0] sm:$0xff]
    %v155 = vld [vmem:[#allocation9 + $0x1f8] sm:$0xff]
    %v156 = vld [vmem:[#allocation9 + $0x200] sm:$0xff]
    %v157 = vld [vmem:[#allocation9 + $0x208] sm:$0xff]
    %v158 = vld [vmem:[#allocation9 + $0x210] sm:$0xff]
    %v159 = vld [vmem:[#allocation9 + $0x218] sm:$0xff]
    %v160 = vld [vmem:[#allocation9 + $0x220] sm:$0xff]
    %v161 = vld [vmem:[#allocation9 + $0x228] sm:$0xff]
    %v162 = vld [vmem:[#allocation9 + $0x230] sm:$0xff]
    %v163 = vld [vmem:[#allocation9 + $0x238] sm:$0xff]
    %v164 = vld [vmem:[#allocation4] sm:$0xff]
    %v165 = vld [vmem:[#allocation4 + $0x8] sm:$0xff]
    %v166 = vld [vmem:[#allocation4 + $0x10] sm:$0xff]
    %v167 = vld [vmem:[#allocation4 + $0x18] sm:$0xff]
    %v168 = vld [vmem:[#allocation4 + $0x20] sm:$0xff]
    %v169 = vld [vmem:[#allocation4 + $0x28] sm:$0xff]
    %v170 = vld [vmem:[#allocation4 + $0x30] sm:$0xff]
    %v171 = vld [vmem:[#allocation4 + $0x38] sm:$0xff]
    %v172 = vld [vmem:[#allocation4 + $0x40] sm:$0xff]
    %v173 = vld [vmem:[#allocation4 + $0x48] sm:$0xff]
    %v174 = vld [vmem:[#allocation4 + $0x50] sm:$0xff]
    %v175 = vld [vmem:[#allocation4 + $0x58] sm:$0xff]
    %v176 = vld [vmem:[#allocation4 + $0x60] sm:$0xff]
    %v177 = vld [vmem:[#allocation4 + $0x68] sm:$0xff]
    %v178 = vld [vmem:[#allocation4 + $0x70] sm:$0xff]
    %v179 = vld [vmem:[#allocation4 + $0x78] sm:$0xff]
    %v180 = vld [vmem:[#allocation4 + $0x80] sm:$0xff]
    %v181 = vld [vmem:[#allocation4 + $0x88] sm:$0xff]
    %v182 = vld [vmem:[#allocation4 + $0x90] sm:$0xff]
    %v183 = vld [vmem:[#allocation4 + $0x98] sm:$0xff]
    %v184 = vld [vmem:[#allocation4 + $0xa0] sm:$0xff]
    %v185 = vld [vmem:[#allocation4 + $0xa8] sm:$0xff]
    %v186 = vld [vmem:[#allocation4 + $0xb0] sm:$0xff]
    %v187 = vld [vmem:[#allocation4 + $0xb8] sm:$0xff]
    %v188 = vld [vmem:[#allocation4 + $0xc0] sm:$0xff]
    %v189 = vld [vmem:[#allocation4 + $0xc8] sm:$0xff]
    %v190 = vld [vmem:[#allocation4 + $0xd0] sm:$0xff]
    %v191 = vld [vmem:[#allocation4 + $0xd8] sm:$0xff]
    %v192 = vld [vmem:[#allocation4 + $0xe0] sm:$0xff]
    %v193 = vld [vmem:[#allocation4 + $0xe8] sm:$0xff]
    %v194 = vld [vmem:[#allocation4 + $0xf0] sm:$0xff]
    %v195 = vld [vmem:[#allocation4 + $0xf8] sm:$0xff]
    %v196 = vld [vmem:[#allocation4 + $0x100] sm:$0xff]
    %v197 = vld [vmem:[#allocation4 + $0x108] sm:$0xff]
    %v198 = vld [vmem:[#allocation4 + $0x110] sm:$0xff]
    %v199 = vld [vmem:[#allocation4 + $0x118] sm:$0xff]
    %v200 = vld [vmem:[#allocation4 + $0x120] sm:$0xff]
    %v201 = vld [vmem:[#allocation4 + $0x128] sm:$0xff]
    %v202 = vld [vmem:[#allocation4 + $0x130] sm:$0xff]
    %v203 = vld [vmem:[#allocation4 + $0x138] sm:$0xff]
    %v204 = vld [vmem:[#allocation4 + $0x140] sm:$0xff]
    %v205 = vld [vmem:[#allocation4 + $0x148] sm:$0xff]
    %v206 = vld [vmem:[#allocation4 + $0x150] sm:$0xff]
    %v207 = vld [vmem:[#allocation4 + $0x158] sm:$0xff]
    %v208 = vld [vmem:[#allocation4 + $0x160] sm:$0xff]
    %v209 = vld [vmem:[#allocation4 + $0x168] sm:$0xff]
    %v210 = vld [vmem:[#allocation4 + $0x170] sm:$0xff]
    %v211 = vld [vmem:[#allocation4 + $0x178] sm:$0xff]
    %v212 = vld [vmem:[#allocation4 + $0x180] sm:$0xff]
    %v213 = vld [vmem:[#allocation4 + $0x188] sm:$0xff]
    %v214 = vld [vmem:[#allocation4 + $0x190] sm:$0xff]
    %v215 = vld [vmem:[#allocation4 + $0x198] sm:$0xff]
    %v216 = vld [vmem:[#allocation4 + $0x1a0] sm:$0xff]
    %v217 = vld [vmem:[#allocation4 + $0x1a8] sm:$0xff]
    %v218 = vld [vmem:[#allocation4 + $0x1b0] sm:$0xff]
    %v219 = vld [vmem:[#allocation4 + $0x1b8] sm:$0xff]
    %v220 = vld [vmem:[#allocation4 + $0x1c0] sm:$0xff]
    %v221 = vld [vmem:[#allocation4 + $0x1c8] sm:$0xff]
    %v222 = vld [vmem:[#allocation4 + $0x1d0] sm:$0xff]
    %v223 = vld [vmem:[#allocation4 + $0x1d8] sm:$0xff]
    %v224 = vld [vmem:[#allocation4 + $0x1e0] sm:$0xff]
    %v225 = vld [vmem:[#allocation4 + $0x1e8] sm:$0xff]
    %v226 = vld [vmem:[#allocation4 + $0x1f0] sm:$0xff]
    %v227 = vld [vmem:[#allocation4 + $0x1f8] sm:$0xff]
    %v228 = vld [vmem:[#allocation4 + $0x200] sm:$0xff]
    %v229 = vld [vmem:[#allocation4 + $0x208] sm:$0xff]
    %v230 = vld [vmem:[#allocation4 + $0x210] sm:$0xff]
    %v231 = vld [vmem:[#allocation4 + $0x218] sm:$0xff]
    %v232 = vld [vmem:[#allocation4 + $0x220] sm:$0xff]
    %v233 = vld [vmem:[#allocation4 + $0x228] sm:$0xff]
    %v234 = vld [vmem:[#allocation4 + $0x230] sm:$0xff]
    %v235 = vld [vmem:[#allocation4 + $0x238] sm:$0xff]
    %v236 = vsub.f32 %v164, %v92
    %v237 = vsub.f32 %v165, %v93
    %v238 = vsub.f32 %v166, %v94
    %v239 = vsub.f32 %v167, %v95
    %v240 = vsub.f32 %v168, %v96
    %v241 = vsub.f32 %v169, %v97
    %v242 = vsub.f32 %v170, %v98
    %v243 = vsub.f32 %v171, %v99
    %v244 = vsub.f32 %v172, %v100
    %v245 = vsub.f32 %v173, %v101
    %v246 = vsub.f32 %v174, %v102
    %v247 = vsub.f32 %v175, %v103
    %v248 = vsub.f32 %v176, %v104
    %v249 = vsub.f32 %v177, %v105
    %v250 = vsub.f32 %v178, %v106
    %v251 = vsub.f32 %v179, %v107
    %v252 = vsub.f32 %v180, %v108
    %v253 = vsub.f32 %v181, %v109
    %v254 = vsub.f32 %v182, %v110
    %v255 = vsub.f32 %v183, %v111
    %v256 = vsub.f32 %v184, %v112
    %v257 = vsub.f32 %v185, %v113
    %v258 = vsub.f32 %v186, %v114
    %v259 = vsub.f32 %v187, %v115
    %v260 = vsub.f32 %v188, %v116
    %v261 = vsub.f32 %v189, %v117
    %v262 = vsub.f32 %v190, %v118
    %v263 = vsub.f32 %v191, %v119
    %v264 = vsub.f32 %v192, %v120
    %v265 = vsub.f32 %v193, %v121
    %v266 = vsub.f32 %v194, %v122
    %v267 = vsub.f32 %v195, %v123
    %v268 = vsub.f32 %v196, %v124
    %v269 = vsub.f32 %v197, %v125
    %v270 = vsub.f32 %v198, %v126
    %v271 = vsub.f32 %v199, %v127
    %v272 = vsub.f32 %v200, %v128
    %v273 = vsub.f32 %v201, %v129
    %v274 = vsub.f32 %v202, %v130
    %v275 = vsub.f32 %v203, %v131
    %v276 = vsub.f32 %v204, %v132
    %v277 = vsub.f32 %v205, %v133
    %v278 = vsub.f32 %v206, %v134
    %v279 = vsub.f32 %v207, %v135
    %v280 = vsub.f32 %v208, %v136
    %v281 = vsub.f32 %v209, %v137
    %v282 = vsub.f32 %v210, %v138
    %v283 = vsub.f32 %v211, %v139
    %v284 = vsub.f32 %v212, %v140
    %v285 = vsub.f32 %v213, %v141
    %v286 = vsub.f32 %v214, %v142
    %v287 = vsub.f32 %v215, %v143
    %v288 = vsub.f32 %v216, %v144
    %v289 = vsub.f32 %v217, %v145
    %v290 = vsub.f32 %v218, %v146
    %v291 = vsub.f32 %v219, %v147
    %v292 = vsub.f32 %v220, %v148
    %v293 = vsub.f32 %v221, %v149
    %v294 = vsub.f32 %v222, %v150
    %v295 = vsub.f32 %v223, %v151
    %v296 = vsub.f32 %v224, %v152
    %v297 = vsub.f32 %v225, %v153
    %v298 = vsub.f32 %v226, %v154
    %v299 = vsub.f32 %v227, %v155
    %v300 = vsub.f32 %v228, %v156
    %v301 = vsub.f32 %v229, %v157
    %v302 = vsub.f32 %v230, %v158
    %v303 = vsub.f32 %v231, %v159
    %v304 = vsub.f32 %v232, %v160
    %v305 = vsub.f32 %v233, %v161
    %v306 = vsub.f32 %v234, %v162
    %v307 = vsub.f32 %v235, %v163
    %v308 = vmul.f32 %v236, %v236
    %v309 = vmul.f32 %v237, %v237
    %v310 = vmul.f32 %v238, %v238
    %v311 = vmul.f32 %v239, %v239
    %v312 = vmul.f32 %v240, %v240
    %v313 = vmul.f32 %v241, %v241
    %v314 = vmul.f32 %v242, %v242
    %v315 = vmul.f32 %v243, %v243
    %v316 = vmul.f32 %v244, %v244
    %v317 = vmul.f32 %v245, %v245
    %v318 = vmul.f32 %v246, %v246
    %v319 = vmul.f32 %v247, %v247
    %v320 = vmul.f32 %v248, %v248
    %v321 = vmul.f32 %v249, %v249
    %v322 = vmul.f32 %v250, %v250
    %v323 = vmul.f32 %v251, %v251
    %v324 = vmul.f32 %v252, %v252
    %v325 = vmul.f32 %v253, %v253
    %v326 = vmul.f32 %v254, %v254
    %v327 = vmul.f32 %v255, %v255
    %v328 = vmul.f32 %v256, %v256
    %v329 = vmul.f32 %v257, %v257
    %v330 = vmul.f32 %v258, %v258
    %v331 = vmul.f32 %v259, %v259
    %v332 = vmul.f32 %v260, %v260
    %v333 = vmul.f32 %v261, %v261
    %v334 = vmul.f32 %v262, %v262
    %v335 = vmul.f32 %v263, %v263
    %v336 = vmul.f32 %v264, %v264
    %v337 = vmul.f32 %v265, %v265
    %v338 = vmul.f32 %v266, %v266
    %v339 = vmul.f32 %v267, %v267
    %v340 = vmul.f32 %v268, %v268
    %v341 = vmul.f32 %v269, %v269
    %v342 = vmul.f32 %v270, %v270
    %v343 = vmul.f32 %v271, %v271
    %v344 = vmul.f32 %v272, %v272
    %v345 = vmul.f32 %v273, %v273
    %v346 = vmul.f32 %v274, %v274
    %v347 = vmul.f32 %v275, %v275
    %v348 = vmul.f32 %v276, %v276
    %v349 = vmul.f32 %v277, %v277
    %v350 = vmul.f32 %v278, %v278
    %v351 = vmul.f32 %v279, %v279
    %v352 = vmul.f32 %v280, %v280
    %v353 = vmul.f32 %v281, %v281
    %v354 = vmul.f32 %v282, %v282
    %v355 = vmul.f32 %v283, %v283
    %v356 = vmul.f32 %v284, %v284
    %v357 = vmul.f32 %v285, %v285
    %v358 = vmul.f32 %v286, %v286
    %v359 = vmul.f32 %v287, %v287
    %v360 = vmul.f32 %v288, %v288
    %v361 = vmul.f32 %v289, %v289
    %v362 = vmul.f32 %v290, %v290
    %v363 = vmul.f32 %v291, %v291
    %v364 = vmul.f32 %v292, %v292
    %v365 = vmul.f32 %v293, %v293
    %v366 = vmul.f32 %v294, %v294
    %v367 = vmul.f32 %v295, %v295
    %v368 = vmul.f32 %v296, %v296
    %v369 = vmul.f32 %v297, %v297
    %v370 = vmul.f32 %v298, %v298
    %v371 = vmul.f32 %v299, %v299
    %v372 = vmul.f32 %v300, %v300
    %v373 = vmul.f32 %v301, %v301
    %v374 = vmul.f32 %v302, %v302
    %v375 = vmul.f32 %v303, %v303
    %v376 = vmul.f32 %v304, %v304
    %v377 = vmul.f32 %v305, %v305
    %v378 = vmul.f32 %v306, %v306
    %v379 = vmul.f32 %v307, %v307
    %v380 = vld [vmem:[#allocation2] sm:$0xff]
    %v381 = vadd.f32 %v308, %v309
    %v382 = vadd.f32 %v381, %v310
    %v383 = vadd.f32 %v382, %v311
    %v384 = vadd.f32 %v383, %v312
    %v385 = vadd.f32 %v384, %v313
    %v386 = vadd.f32 %v385, %v314
    %v387 = vadd.f32 %v386, %v315
    %v388 = vadd.f32 %v387, %v316
    %v389 = vadd.f32 %v388, %v317
    %v390 = vadd.f32 %v389, %v318
    %v391 = vadd.f32 %v390, %v319
    %v392 = vadd.f32 %v391, %v320
    %v393 = vadd.f32 %v392, %v321
    %v394 = vadd.f32 %v393, %v322
    %v395 = vadd.f32 %v394, %v323
    %v396 = vadd.f32 %v395, %v324
    %v397 = vadd.f32 %v396, %v325
    %v398 = vadd.f32 %v397, %v326
    %v399 = vadd.f32 %v398, %v327
    %v400 = vadd.f32 %v399, %v328
    %v401 = vadd.f32 %v400, %v329
    %v402 = vadd.f32 %v401, %v330
    %v403 = vadd.f32 %v402, %v331
    %v404 = vadd.f32 %v403, %v332
    %v405 = vadd.f32 %v404, %v333
    %v406 = vadd.f32 %v405, %v334
    %v407 = vadd.f32 %v406, %v335
    %v408 = vadd.f32 %v407, %v336
    %v409 = vadd.f32 %v408, %v337
    %v410 = vadd.f32 %v409, %v338
    %v411 = vadd.f32 %v410, %v339
    %v412 = vadd.f32 %v411, %v340
    %v413 = vadd.f32 %v412, %v341
    %v414 = vadd.f32 %v413, %v342
    %v415 = vadd.f32 %v414, %v343
    %v416 = vadd.f32 %v415, %v344
    %v417 = vadd.f32 %v416, %v345
    %v418 = vadd.f32 %v417, %v346
    %v419 = vadd.f32 %v418, %v347
    %v420 = vadd.f32 %v419, %v348
    %v421 = vadd.f32 %v420, %v349
    %v422 = vadd.f32 %v421, %v350
    %v423 = vadd.f32 %v422, %v351
    %v424 = vadd.f32 %v423, %v352
    %v425 = vadd.f32 %v424, %v353
    %v426 = vadd.f32 %v425, %v354
    %v427 = vadd.f32 %v426, %v355
    %v428 = vadd.f32 %v427, %v356
    %v429 = vadd.f32 %v428, %v357
    %v430 = vadd.f32 %v429, %v358
    %v431 = vadd.f32 %v430, %v359
    %v432 = vadd.f32 %v431, %v360
    %v433 = vadd.f32 %v432, %v361
    %v434 = vadd.f32 %v433, %v362
    %v435 = vadd.f32 %v434, %v363
    %v436 = vadd.f32 %v435, %v364
    %v437 = vadd.f32 %v436, %v365
    %v438 = vadd.f32 %v437, %v366
    %v439 = vadd.f32 %v438, %v367
    %v440 = vadd.f32 %v439, %v368
    %v441 = vadd.f32 %v440, %v369
    %v442 = vadd.f32 %v441, %v370
    %v443 = vadd.f32 %v442, %v371
    %v444 = vadd.f32 %v443, %v372
    %v445 = vadd.f32 %v444, %v373
    %v446 = vadd.f32 %v445, %v374
    %v447 = vadd.f32 %v446, %v375
    %v448 = vadd.f32 %v447, %v376
    %v449 = vadd.f32 %v448, %v377
    %v450 = vadd.f32 %v449, %v378
    %v451 = vadd.f32 %v450, %v379
    %v452 = vadd.f32 %v380, %v451
    %453 = vst [vmem:[#allocation2] sm:$0xff] %v452
    %v454 = vld [vmem:[#allocation7] sm:$0xff]
    %v455 = vld [vmem:[#allocation7 + $0x8] sm:$0xff]
    %v456 = vld [vmem:[#allocation7 + $0x10] sm:$0xff]
    %v457 = vld [vmem:[#allocation7 + $0x18] sm:$0xff]
    %v458 = vld [vmem:[#allocation7 + $0x20] sm:$0xff]
    %v459 = vld [vmem:[#allocation7 + $0x28] sm:$0xff]
    %v460 = vld [vmem:[#allocation7 + $0x30] sm:$0xff]
    %v461 = vld [vmem:[#allocation7 + $0x38] sm:$0xff]
    %v462 = vld [vmem:[#allocation7 + $0x40] sm:$0xff]
    %v463 = vld [vmem:[#allocation7 + $0x48] sm:$0xff]
    %v464 = vld [vmem:[#allocation7 + $0x50] sm:$0xff]
    %v465 = vld [vmem:[#allocation7 + $0x58] sm:$0xff]
    %v466 = vld [vmem:[#allocation7 + $0x60] sm:$0xff]
    %v467 = vld [vmem:[#allocation7 + $0x68] sm:$0xff]
    %v468 = vld [vmem:[#allocation7 + $0x70] sm:$0xff]
    %v469 = vld [vmem:[#allocation7 + $0x78] sm:$0xff]
    %v470 = vld [vmem:[#allocation7 + $0x80] sm:$0xff]
    %v471 = vld [vmem:[#allocation7 + $0x88] sm:$0xff]
    %v472 = vld [vmem:[#allocation7 + $0x90] sm:$0xff]
    %v473 = vld [vmem:[#allocation7 + $0x98] sm:$0xff]
    %v474 = vld [vmem:[#allocation7 + $0xa0] sm:$0xff]
    %v475 = vld [vmem:[#allocation7 + $0xa8] sm:$0xff]
    %v476 = vld [vmem:[#allocation7 + $0xb0] sm:$0xff]
    %v477 = vld [vmem:[#allocation7 + $0xb8] sm:$0xff]
    %v478 = vld [vmem:[#allocation7 + $0xc0] sm:$0xff]
    %v479 = vld [vmem:[#allocation7 + $0xc8] sm:$0xff]
    %v480 = vld [vmem:[#allocation7 + $0xd0] sm:$0xff]
    %v481 = vld [vmem:[#allocation7 + $0xd8] sm:$0xff]
    %v482 = vld [vmem:[#allocation7 + $0xe0] sm:$0xff]
    %v483 = vld [vmem:[#allocation7 + $0xe8] sm:$0xff]
    %v484 = vld [vmem:[#allocation7 + $0xf0] sm:$0xff]
    %v485 = vld [vmem:[#allocation7 + $0xf8] sm:$0xff]
    %v486 = vld [vmem:[#allocation7 + $0x100] sm:$0xff]
    %v487 = vld [vmem:[#allocation7 + $0x108] sm:$0xff]
    %v488 = vld [vmem:[#allocation7 + $0x110] sm:$0xff]
    %v489 = vld [vmem:[#allocation7 + $0x118] sm:$0xff]
    %v490 = vld [vmem:[#allocation7 + $0x120] sm:$0xff]
    %v491 = vld [vmem:[#allocation7 + $0x128] sm:$0xff]
    %v492 = vld [vmem:[#allocation7 + $0x130] sm:$0xff]
    %v493 = vld [vmem:[#allocation7 + $0x138] sm:$0xff]
    %v494 = vld [vmem:[#allocation7 + $0x140] sm:$0xff]
    %v495 = vld [vmem:[#allocation7 + $0x148] sm:$0xff]
    %v496 = vld [vmem:[#allocation7 + $0x150] sm:$0xff]
    %v497 = vld [vmem:[#allocation7 + $0x158] sm:$0xff]
    %v498 = vld [vmem:[#allocation7 + $0x160] sm:$0xff]
    %v499 = vld [vmem:[#allocation7 + $0x168] sm:$0xff]
    %v500 = vld [vmem:[#allocation7 + $0x170] sm:$0xff]
    %v501 = vld [vmem:[#allocation7 + $0x178] sm:$0xff]
    %v502 = vld [vmem:[#allocation7 + $0x180] sm:$0xff]
    %v503 = vld [vmem:[#allocation7 + $0x188] sm:$0xff]
    %v504 = vld [vmem:[#allocation7 + $0x190] sm:$0xff]
    %v505 = vld [vmem:[#allocation7 + $0x198] sm:$0xff]
    %v506 = vld [vmem:[#allocation7 + $0x1a0] sm:$0xff]
    %v507 = vld [vmem:[#allocation7 + $0x1a8] sm:$0xff]
    %v508 = vld [vmem:[#allocation7 + $0x1b0] sm:$0xff]
    %v509 = vld [vmem:[#allocation7 + $0x1b8] sm:$0xff]
    %v510 = vld [vmem:[#allocation7 + $0x1c0] sm:$0xff]
    %v511 = vld [vmem:[#allocation7 + $0x1c8] sm:$0xff]
    %v512 = vld [vmem:[#allocation7 + $0x1d0] sm:$0xff]
    %v513 = vld [vmem:[#allocation7 + $0x1d8] sm:$0xff]
    %v514 = vld [vmem:[#allocation7 + $0x1e0] sm:$0xff]
    %v515 = vld [vmem:[#allocation7 + $0x1e8] sm:$0xff]
    %v516 = vld [vmem:[#allocation7 + $0x1f0] sm:$0xff]
    %v517 = vld [vmem:[#allocation7 + $0x1f8] sm:$0xff]
    %v518 = vld [vmem:[#allocation7 + $0x200] sm:$0xff]
    %v519 = vld [vmem:[#allocation7 + $0x208] sm:$0xff]
    %v520 = vld [vmem:[#allocation7 + $0x210] sm:$0xff]
    %v521 = vld [vmem:[#allocation7 + $0x218] sm:$0xff]
    %v522 = vld [vmem:[#allocation7 + $0x220] sm:$0xff]
    %v523 = vld [vmem:[#allocation7 + $0x228] sm:$0xff]
    %v524 = vld [vmem:[#allocation7 + $0x230] sm:$0xff]
    %v525 = vld [vmem:[#allocation7 + $0x238] sm:$0xff]
    %v526 = vsub.f32 %v454, %v92
    %v527 = vsub.f32 %v455, %v93
    %v528 = vsub.f32 %v456, %v94
    %v529 = vsub.f32 %v457, %v95
    %v530 = vsub.f32 %v458, %v96
    %v531 = vsub.f32 %v459, %v97
    %v532 = vsub.f32 %v460, %v98
    %v533 = vsub.f32 %v461, %v99
    %v534 = vsub.f32 %v462, %v100
    %v535 = vsub.f32 %v463, %v101
    %v536 = vsub.f32 %v464, %v102
    %v537 = vsub.f32 %v465, %v103
    %v538 = vsub.f32 %v466, %v104
    %v539 = vsub.f32 %v467, %v105
    %v540 = vsub.f32 %v468, %v106
    %v541 = vsub.f32 %v469, %v107
    %v542 = vsub.f32 %v470, %v108
    %v543 = vsub.f32 %v471, %v109
    %v544 = vsub.f32 %v472, %v110
    %v545 = vsub.f32 %v473, %v111
    %v546 = vsub.f32 %v474, %v112
    %v547 = vsub.f32 %v475, %v113
    %v548 = vsub.f32 %v476, %v114
    %v549 = vsub.f32 %v477, %v115
    %v550 = vsub.f32 %v478, %v116
    %v551 = vsub.f32 %v479, %v117
    %v552 = vsub.f32 %v480, %v118
    %v553 = vsub.f32 %v481, %v119
    %v554 = vsub.f32 %v482, %v120
    %v555 = vsub.f32 %v483, %v121
    %v556 = vsub.f32 %v484, %v122
    %v557 = vsub.f32 %v485, %v123
    %v558 = vsub.f32 %v486, %v124
    %v559 = vsub.f32 %v487, %v125
    %v560 = vsub.f32 %v488, %v126
    %v561 = vsub.f32 %v489, %v127
    %v562 = vsub.f32 %v490, %v128
    %v563 = vsub.f32 %v491, %v129
    %v564 = vsub.f32 %v492, %v130
    %v565 = vsub.f32 %v493, %v131
    %v566 = vsub.f32 %v494, %v132
    %v567 = vsub.f32 %v495, %v133
    %v568 = vsub.f32 %v496, %v134
    %v569 = vsub.f32 %v497, %v135
    %v570 = vsub.f32 %v498, %v136
    %v571 = vsub.f32 %v499, %v137
    %v572 = vsub.f32 %v500, %v138
    %v573 = vsub.f32 %v501, %v139
    %v574 = vsub.f32 %v502, %v140
    %v575 = vsub.f32 %v503, %v141
    %v576 = vsub.f32 %v504, %v142
    %v577 = vsub.f32 %v505, %v143
    %v578 = vsub.f32 %v506, %v144
    %v579 = vsub.f32 %v507, %v145
    %v580 = vsub.f32 %v508, %v146
    %v581 = vsub.f32 %v509, %v147
    %v582 = vsub.f32 %v510, %v148
    %v583 = vsub.f32 %v511, %v149
    %v584 = vsub.f32 %v512, %v150
    %v585 = vsub.f32 %v513, %v151
    %v586 = vsub.f32 %v514, %v152
    %v587 = vsub.f32 %v515, %v153
    %v588 = vsub.f32 %v516, %v154
    %v589 = vsub.f32 %v517, %v155
    %v590 = vsub.f32 %v518, %v156
    %v591 = vsub.f32 %v519, %v157
    %v592 = vsub.f32 %v520, %v158
    %v593 = vsub.f32 %v521, %v159
    %v594 = vsub.f32 %v522, %v160
    %v595 = vsub.f32 %v523, %v161
    %v596 = vsub.f32 %v524, %v162
    %v597 = vsub.f32 %v525, %v163
    %v598 = vmul.f32 %v526, %v526
    %v599 = vmul.f32 %v527, %v527
    %v600 = vmul.f32 %v528, %v528
    %v601 = vmul.f32 %v529, %v529
    %v602 = vmul.f32 %v530, %v530
    %v603 = vmul.f32 %v531, %v531
    %v604 = vmul.f32 %v532, %v532
    %v605 = vmul.f32 %v533, %v533
    %v606 = vmul.f32 %v534, %v534
    %v607 = vmul.f32 %v535, %v535
    %v608 = vmul.f32 %v536, %v536
    %v609 = vmul.f32 %v537, %v537
    %v610 = vmul.f32 %v538, %v538
    %v611 = vmul.f32 %v539, %v539
    %v612 = vmul.f32 %v540, %v540
    %v613 = vmul.f32 %v541, %v541
    %v614 = vmul.f32 %v542, %v542
    %v615 = vmul.f32 %v543, %v543
    %v616 = vmul.f32 %v544, %v544
    %v617 = vmul.f32 %v545, %v545
    %v618 = vmul.f32 %v546, %v546
    %v619 = vmul.f32 %v547, %v547
    %v620 = vmul.f32 %v548, %v548
    %v621 = vmul.f32 %v549, %v549
    %v622 = vmul.f32 %v550, %v550
    %v623 = vmul.f32 %v551, %v551
    %v624 = vmul.f32 %v552, %v552
    %v625 = vmul.f32 %v553, %v553
    %v626 = vmul.f32 %v554, %v554
    %v627 = vmul.f32 %v555, %v555
    %v628 = vmul.f32 %v556, %v556
    %v629 = vmul.f32 %v557, %v557
    %v630 = vmul.f32 %v558, %v558
    %v631 = vmul.f32 %v559, %v559
    %v632 = vmul.f32 %v560, %v560
    %v633 = vmul.f32 %v561, %v561
    %v634 = vmul.f32 %v562, %v562
    %v635 = vmul.f32 %v563, %v563
    %v636 = vmul.f32 %v564, %v564
    %v637 = vmul.f32 %v565, %v565
    %v638 = vmul.f32 %v566, %v566
    %v639 = vmul.f32 %v567, %v567
    %v640 = vmul.f32 %v568, %v568
    %v641 = vmul.f32 %v569, %v569
    %v642 = vmul.f32 %v570, %v570
    %v643 = vmul.f32 %v571, %v571
    %v644 = vmul.f32 %v572, %v572
    %v645 = vmul.f32 %v573, %v573
    %v646 = vmul.f32 %v574, %v574
    %v647 = vmul.f32 %v575, %v575
    %v648 = vmul.f32 %v576, %v576
    %v649 = vmul.f32 %v577, %v577
    %v650 = vmul.f32 %v578, %v578
    %v651 = vmul.f32 %v579, %v579
    %v652 = vmul.f32 %v580, %v580
    %v653 = vmul.f32 %v581, %v581
    %v654 = vmul.f32 %v582, %v582
    %v655 = vmul.f32 %v583, %v583
    %v656 = vmul.f32 %v584, %v584
    %v657 = vmul.f32 %v585, %v585
    %v658 = vmul.f32 %v586, %v586
    %v659 = vmul.f32 %v587, %v587
    %v660 = vmul.f32 %v588, %v588
    %v661 = vmul.f32 %v589, %v589
    %v662 = vmul.f32 %v590, %v590
    %v663 = vmul.f32 %v591, %v591
    %v664 = vmul.f32 %v592, %v592
    %v665 = vmul.f32 %v593, %v593
    %v666 = vmul.f32 %v594, %v594
    %v667 = vmul.f32 %v595, %v595
    %v668 = vmul.f32 %v596, %v596
    %v669 = vmul.f32 %v597, %v597
    %v670 = vld [vmem:[#allocation3] sm:$0xff]
    %v671 = vadd.f32 %v598, %v599
    %v672 = vadd.f32 %v671, %v600
    %v673 = vadd.f32 %v672, %v601
    %v674 = vadd.f32 %v673, %v602
    %v675 = vadd.f32 %v674, %v603
    %v676 = vadd.f32 %v675, %v604
    %v677 = vadd.f32 %v676, %v605
    %v678 = vadd.f32 %v677, %v606
    %v679 = vadd.f32 %v678, %v607
    %v680 = vadd.f32 %v679, %v608
    %v681 = vadd.f32 %v680, %v609
    %v682 = vadd.f32 %v681, %v610
    %v683 = vadd.f32 %v682, %v611
    %v684 = vadd.f32 %v683, %v612
    %v685 = vadd.f32 %v684, %v613
    %v686 = vadd.f32 %v685, %v614
    %v687 = vadd.f32 %v686, %v615
    %v688 = vadd.f32 %v687, %v616
    %v689 = vadd.f32 %v688, %v617
    %v690 = vadd.f32 %v689, %v618
    %v691 = vadd.f32 %v690, %v619
    %v692 = vadd.f32 %v691, %v620
    %v693 = vadd.f32 %v692, %v621
    %v694 = vadd.f32 %v693, %v622
    %v695 = vadd.f32 %v694, %v623
    %v696 = vadd.f32 %v695, %v624
    %v697 = vadd.f32 %v696, %v625
    %v698 = vadd.f32 %v697, %v626
    %v699 = vadd.f32 %v698, %v627
    %v700 = vadd.f32 %v699, %v628
    %v701 = vadd.f32 %v700, %v629
    %v702 = vadd.f32 %v701, %v630
    %v703 = vadd.f32 %v702, %v631
    %v704 = vadd.f32 %v703, %v632
    %v705 = vadd.f32 %v704, %v633
    %v706 = vadd.f32 %v705, %v634
    %v707 = vadd.f32 %v706, %v635
    %v708 = vadd.f32 %v707, %v636
    %v709 = vadd.f32 %v708, %v637
    %v710 = vadd.f32 %v709, %v638
    %v711 = vadd.f32 %v710, %v639
    %v712 = vadd.f32 %v711, %v640
    %v713 = vadd.f32 %v712, %v641
    %v714 = vadd.f32 %v713, %v642
    %v715 = vadd.f32 %v714, %v643
    %v716 = vadd.f32 %v715, %v644
    %v717 = vadd.f32 %v716, %v645
    %v718 = vadd.f32 %v717, %v646
    %v719 = vadd.f32 %v718, %v647
    %v720 = vadd.f32 %v719, %v648
    %v721 = vadd.f32 %v720, %v649
    %v722 = vadd.f32 %v721, %v650
    %v723 = vadd.f32 %v722, %v651
    %v724 = vadd.f32 %v723, %v652
    %v725 = vadd.f32 %v724, %v653
    %v726 = vadd.f32 %v725, %v654
    %v727 = vadd.f32 %v726, %v655
    %v728 = vadd.f32 %v727, %v656
    %v729 = vadd.f32 %v728, %v657
    %v730 = vadd.f32 %v729, %v658
    %v731 = vadd.f32 %v730, %v659
    %v732 = vadd.f32 %v731, %v660
    %v733 = vadd.f32 %v732, %v661
    %v734 = vadd.f32 %v733, %v662
    %v735 = vadd.f32 %v734, %v663
    %v736 = vadd.f32 %v735, %v664
    %v737 = vadd.f32 %v736, %v665
    %v738 = vadd.f32 %v737, %v666
    %v739 = vadd.f32 %v738, %v667
    %v740 = vadd.f32 %v739, %v668
    %v741 = vadd.f32 %v740, %v669
    %v742 = vadd.f32 %v670, %v741
    %743 = vst [vmem:[#allocation3] sm:$0xff] %v742
    // Predicated region
    $region30: #{tpu_custom_call.1} parent=1 // pred_check
      %p744 = pneg %p86
    $region31: #{tpu_custom_call.1} parent=1 // pred_check_branch
      %746 = sbr.rel (%p744) target = $region33
    $region32: #{tpu_custom_call.1} parent=1 // pred_region
      %v747 = vld [vmem:[#allocation2] sm:$0xff]
      %748 = vadd.xlane.f32.xlu0 %v747
      %v749 = vpop.xlane.xlu0 %748
      %v750 = vrot.slane %v749, 4
      %v751 = vadd.f32 %v749, %v750
      %v752 = vrot.slane %v751, 2
      %v753 = vadd.f32 %v751, %v752
      %v754 = vrot.slane %v753, 1
      %v755 = vadd.f32 %v753, %v754
      %s756 = vtos %v755
      %s757 = scalar_lea.smem [#allocation10], 0
      %758 = sst [smem:[%s757]] %s756
      %v759 = vld [vmem:[#allocation3] sm:$0xff]
      %760 = vadd.xlane.f32.xlu0 %v759
      %v761 = vpop.xlane.xlu0 %760
      %v762 = vrot.slane %v761, 4
      %v763 = vadd.f32 %v761, %v762
      %v764 = vrot.slane %v763, 2
      %v765 = vadd.f32 %v763, %v764
      %v766 = vrot.slane %v765, 1
      %v767 = vadd.f32 %v765, %v766
      %s768 = vtos %v767
      %s769 = scalar_lea.smem [#allocation10], 1
      %770 = sst [smem:[%s769]] %s768
    $region33: #{tpu_custom_call.1} parent=1 // pred_fallthru
      _
    // Predicated region
    $region34: #{tpu_custom_call.1} parent=1 // pred_check
      _
    $region35: #{tpu_custom_call.1} parent=1 // pred_check_branch
      %772 = sbr.rel (0) target = $region37
    $region36: #{tpu_custom_call.1} parent=1 // pred_region
      %s774 = ssub.s32 16, 16
      %775 = vsyncadd [#allocation6], %s774
      %778 = dma.smem_to_hbm [#allocation10], 16, %s3, [#allocation6]
    $region37: #{tpu_custom_call.1} parent=1 // pred_fallthru
      _
    // Predicated region
    $region38: #{tpu_custom_call.1} parent=1 // pred_check
      _
    $region39: #{tpu_custom_call.1} parent=1 // pred_check_branch
      %780 = sbr.rel (0) target = $region41
    $region40: #{tpu_custom_call.1} parent=1 // pred_region
      %781 = dma.done [#allocation6], 16
    $region41: #{tpu_custom_call.1} parent=1 // pred_fallthru
      _
    %782 = sfence
    %783 = vsyncpa [#allocation5], 1
    %784 = vsyncpa [#allocation8], 1
    %785 = vsyncpa [#allocation6], 1

</llo_original>
